<compile_context>
chip_gen: v6e
topology: v6e:2x2x1
jax: 0.10.0
libtpu: 0.0.40
codegen_flags: <defaults>
</compile_context>

<pallas_src>
import functools

import jax
import jax.numpy as jnp
from jax import lax
from jax.experimental import pallas as pl
from jax.experimental.pallas import tpu as pltpu


def _round_up(x, m):
    return ((x + m - 1) // m) * m


def focal_loss_kernel(n_ref, logits_ref, targets_ref, alpha_t_ref, out_ref,
                      *, gamma: float):
    x = logits_ref[...].astype(jnp.float32)          # (tn, C), bf16/f32 input
    tgt = targets_ref[...]                           # (tn, 1) int32
    alpha_t = alpha_t_ref[...].astype(jnp.float32)   # (tn, 1) alpha[target]

    tn, c = x.shape

    # Numerically stable log-softmax along the class (lane) axis.
    m = jnp.max(x, axis=-1, keepdims=True)                      # (tn, 1)
    denom = jnp.sum(jnp.exp(x - m), axis=-1, keepdims=True)     # (tn, 1)

    # One-hot target mask built in-register (== scatter_(1, ids, 1.0)).
    class_ids = lax.broadcasted_iota(jnp.int32, (tn, c), 1)
    class_mask = class_ids == tgt                                # (tn, C) bool

    # Logit gathered at the target class.
    x_t = jnp.sum(jnp.where(class_mask, x, 0.0), axis=-1, keepdims=True)

    log_p = x_t - m - jnp.log(denom)               # log softmax[target] (tn,1)
    probs = jnp.exp(log_p)
    om = 1.0 - probs                               # >= 0 since log_p <= 0

    # Integer gamma -> repeated multiply (VALU) instead of exp/log on the EUP;
    # also avoids NaN from exp(gamma*log(0)) when probs == 1.
    g_int = int(gamma)
    if float(g_int) == float(gamma) and 0 <= g_int <= 8:
        focal = jnp.ones_like(om)
        for _ in range(g_int):
            focal = focal * om
    else:
        focal = jnp.power(om, gamma)

    row_loss = -alpha_t * focal * log_p            # (tn, 1)

    # Mask rows of the (unpadded) partial last tile.  Must stay a jnp.where
    # (select), so undefined boundary-block values cannot inject NaN/Inf.
    n_total = n_ref[0]
    base = pl.program_id(0) * tn
    row_ids = base + lax.broadcasted_iota(jnp.int32, (tn, 1), 0)
    row_loss = jnp.where(row_ids < n_total, row_loss, 0.0)

    partial = jnp.sum(row_loss)

    # Lane-dense, fully (8,128)-aligned output block: partial at [0,0].
    sub = lax.broadcasted_iota(jnp.int32, (8, 128), 0)
    lane = lax.broadcasted_iota(jnp.int32, (8, 128), 1)
    out_ref[...] = jnp.where((sub == 0) & (lane == 0), partial, 0.0)


def _pick_tile_rows(n, c, itemsize):
    """Row-tile size: ~2 MiB logits block, lane-padding-aware VMEM budget."""
    c_pad = _round_up(c, 128)
    # HBM-efficiency target: 0.5-2 MiB blocks reach ~85% of HBM roofline.
    tn_blk = (2 * 1024 * 1024) // (c_pad * itemsize)
    # VMEM budget: 2x double-buffered logits block + 2x double-buffered
    # (tn,1)->(tn,128) lane-padded targets/alpha blocks + ~5 f32 tile temps,
    # kept under 24 MiB (scoped limit set to 32 MiB; safe on v5e/v6e/v7x).
    per_row_bytes = 2 * c_pad * itemsize + 2 * 2 * 128 * 4 + 5 * c_pad * 4
    tn_vmem = (24 * 1024 * 1024) // per_row_bytes
    tn = min(tn_blk, tn_vmem)
    # Keep the grid >= 2 so the "parallel" axis shards across both v7x cores.
    tn = min(tn, _round_up(pl.cdiv(n, 2), 8))
    tn = min(tn, _round_up(n, 8))
    return max(8, (tn // 8) * 8)


def focal_loss(logits, targets, alpha, *, gamma=2.0, size_average=True,
               tile_rows=None):
    """logits: (N, C) f32/bf16, targets: (N,) int, alpha: (C,) float."""
    n, c = logits.shape
    itemsize = jnp.dtype(logits.dtype).itemsize

    if n <= 8:
        tn = n                                   # single full-extent block
    elif tile_rows is not None:
        tn = max(8, (min(tile_rows, n) // 8) * 8)
    else:
        tn = _pick_tile_rows(n, c, itemsize)
    grid = pl.cdiv(n, tn)

    # No jnp.pad: partial last tile is handled by the in-kernel row mask.
    targets2d = targets.reshape(n, 1).astype(jnp.int32)
    # Alpha gather hoisted out of the kernel: 4 B/row instead of a (tn,C)
    # select + cross-lane reduce per tile.
    alpha_t = alpha.astype(jnp.float32)[targets].reshape(n, 1)
    n_arr = jnp.array([n], dtype=jnp.int32)

    kernel = functools.partial(focal_loss_kernel, gamma=float(gamma))

    cost = pl.CostEstimate(
        flops=6 * n * c,
        transcendentals=n * c + 3 * n,
        bytes_accessed=n * c * itemsize + n * 8 + grid * 8 * 128 * 4 + 4,
    )

    partials = pl.pallas_call(
        kernel,
        out_shape=jax.ShapeDtypeStruct((grid * 8, 128), jnp.float32),
        grid=(grid,),
        in_specs=[
            pl.BlockSpec(memory_space=pltpu.MemorySpace.SMEM),   # n_total
            pl.BlockSpec((tn, c), lambda i: (i, 0)),             # logits tile
            pl.BlockSpec((tn, 1), lambda i: (i, 0)),             # target ids
            pl.BlockSpec((tn, 1), lambda i: (i, 0)),             # alpha[target]
        ],
        out_specs=pl.BlockSpec((8, 128), lambda i: (i, 0)),
        compiler_params=pltpu.CompilerParams(
            dimension_semantics=("parallel",),
            vmem_limit_bytes=32 * 1024 * 1024,
        ),
        cost_estimate=cost,
    )(n_arr, logits, targets2d, alpha_t)

    total = jnp.sum(partials)
    if size_average:
        total = total / jnp.float32(n)
    return total


def focal_loss_ref(logits, targets, alpha, *, gamma=2.0, size_average=True):
    p = jax.nn.softmax(logits.astype(jnp.float32), axis=1)
    n = logits.shape[0]
    probs = p[jnp.arange(n), targets]
    a = alpha.astype(jnp.float32)[targets]
    batch_loss = -a * jnp.power(1.0 - probs, gamma) * jnp.log(probs)
    return batch_loss.mean() if size_average else batch_loss.sum()


if __name__ == "__main__":
    key = jax.random.PRNGKey(0)

    # Case 1: small shapes, partial last tile without padding (N=12, tn=8,
    # grid=2 so both v7x cores would be used), mean reduction.
    N, C = 12, 16
    k1, k2 = jax.random.split(key)
    logits = jax.random.normal(k1, (N, C), dtype=jnp.float32)
    targets = jax.random.randint(k2, (N,), 0, C, dtype=jnp.int32)
    alpha = jnp.ones((C,), dtype=jnp.float32)   # alpha=None -> ones(class_num)

    loss = focal_loss(logits, targets, alpha, gamma=2.0, size_average=True)
    jax.block_until_ready(loss)
    ref = focal_loss_ref(logits, targets, alpha, gamma=2.0, size_average=True)
    assert jnp.allclose(loss, ref, rtol=2e-5, atol=1e-5), (loss, ref)

    # Case 2: forced multi-tile grid with a ragged last tile (N=20, tn=8 ->
    # grid=3, last tile half empty), sum reduction, non-uniform alpha.
    N2, C2 = 20, 16
    k3, k4 = jax.random.split(k1)
    logits2 = jax.random.normal(k3, (N2, C2), dtype=jnp.float32)
    targets2 = jax.random.randint(k4, (N2,), 0, C2, dtype=jnp.int32)
    alpha2 = jnp.linspace(0.25, 1.0, C2, dtype=jnp.float32)

    loss2 = focal_loss(logits2, targets2, alpha2, gamma=2.0,
                       size_average=False, tile_rows=8)
    jax.block_until_ready(loss2)
    ref2 = focal_loss_ref(logits2, targets2, alpha2, gamma=2.0,
                          size_average=False)
    assert jnp.allclose(loss2, ref2, rtol=2e-5, atol=1e-5), (loss2, ref2)

    # Case 3: bf16 logits passed straight into the kernel (halves HBM bytes
    # of the dominant stream); compute stays f32 in-register.
    N3, C3 = 16, 32
    k5, k6 = jax.random.split(k3)
    logits3 = jax.random.normal(k5, (N3, C3), dtype=jnp.float32).astype(
        jnp.bfloat16)
    targets3 = jax.random.randint(k6, (N3,), 0, C3, dtype=jnp.int32)
    alpha3 = jnp.ones((C3,), dtype=jnp.float32)

    loss3 = focal_loss(logits3, targets3, alpha3, gamma=2.0, size_average=True)
    jax.block_until_ready(loss3)
    ref3 = focal_loss_ref(logits3, targets3, alpha3, gamma=2.0,
                          size_average=True)
    assert jnp.allclose(loss3, ref3, rtol=1e-4, atol=1e-5), (loss3, ref3)

    print("KERNEL_OK")
</pallas_src>

<mosaic_0001>
module attributes {stable_mosaic.version = 11 : i64} {
  func.func @focal_loss_kernel(%arg0: i32, %arg1: memref<1xi32, #tpu.memory_space<smem>>, %arg2: memref<8x16xf32, #tpu.memory_space<vmem>>, %arg3: memref<8x1xi32, #tpu.memory_space<vmem>>, %arg4: memref<8x1xf32, #tpu.memory_space<vmem>>, %arg5: memref<8x128xf32, #tpu.memory_space<vmem>>) attributes {dimension_semantics = [#tpu.dimension_semantics<parallel>], iteration_bounds = array<i64: 2>, scalar_prefetch = 0 : i64, scratch_operands = 0 : i64, tpu.core_type = #tpu.core_type<tc>, window_params = [{transform_indices = @transform_0, window_bounds = array<i64: 1>}, {transform_indices = @transform_1, window_bounds = array<i64: 8, 16>}, {transform_indices = @transform_2, window_bounds = array<i64: 8, 1>}, {transform_indices = @transform_3, window_bounds = array<i64: 8, 1>}, {transform_indices = @transform_4, window_bounds = array<i64: 8, 128>}]} {
    %c0 = arith.constant 0 : index
    %c0_0 = arith.constant 0 : index
    %0 = vector.load %arg2[%c0, %c0_0] : memref<8x16xf32, #tpu.memory_space<vmem>>, vector<8x16xf32>
    %c0_1 = arith.constant 0 : index
    %c0_2 = arith.constant 0 : index
    %1 = vector.load %arg3[%c0_1, %c0_2] : memref<8x1xi32, #tpu.memory_space<vmem>>, vector<8x1xi32>
    %c0_3 = arith.constant 0 : index
    %c0_4 = arith.constant 0 : index
    %2 = vector.load %arg4[%c0_3, %c0_4] : memref<8x1xf32, #tpu.memory_space<vmem>>, vector<8x1xf32>
    %cst = arith.constant dense<0xFF800000> : vector<8xf32>
    %3 = vector.multi_reduction <maximumf>, %0, %cst [1] : vector<8x16xf32> to vector<8xf32>
    %4 = vector.shape_cast %3 : vector<8xf32> to vector<8x1xf32>
    %5 = vector.broadcast %4 : vector<8x1xf32> to vector<8x16xf32>
    %6 = arith.subf %0, %5 : vector<8x16xf32>
    %7 = math.exp %6 : vector<8x16xf32>
    %cst_5 = arith.constant dense<0.000000e+00> : vector<8xf32>
    %8 = vector.multi_reduction <add>, %7, %cst_5 [1] : vector<8x16xf32> to vector<8xf32>
    %9 = vector.shape_cast %8 : vector<8xf32> to vector<8x1xf32>
    %10 = tpu.iota {dimensions = array<i32: 1>} : vector<8x16xi32>
    %11 = vector.broadcast %1 : vector<8x1xi32> to vector<8x16xi32>
    %12 = arith.cmpi eq, %10, %11 : vector<8x16xi32>
    %cst_6 = arith.constant 0.000000e+00 : f32
    %13 = vector.broadcast %cst_6 : f32 to vector<8x16xf32>
    %14 = arith.select %12, %0, %13 : vector<8x16xi1>, vector<8x16xf32>
    %cst_7 = arith.constant dense<0.000000e+00> : vector<8xf32>
    %15 = vector.multi_reduction <add>, %14, %cst_7 [1] : vector<8x16xf32> to vector<8xf32>
    %16 = vector.shape_cast %15 : vector<8xf32> to vector<8x1xf32>
    %17 = arith.subf %16, %4 : vector<8x1xf32>
    %18 = math.log %9 : vector<8x1xf32>
    %19 = arith.subf %17, %18 : vector<8x1xf32>
    %20 = math.exp %19 : vector<8x1xf32>
    %cst_8 = arith.constant 1.000000e+00 : f32
    %21 = vector.broadcast %cst_8 : f32 to vector<8x1xf32>
    %22 = arith.subf %21, %20 : vector<8x1xf32>
    %cst_9 = arith.constant 1.000000e+00 : f32
    %23 = vector.broadcast %cst_9 : f32 to vector<8x1xf32>
    %24 = arith.mulf %23, %22 : vector<8x1xf32>
    %25 = arith.mulf %24, %22 : vector<8x1xf32>
    %cst_10 = arith.constant 0.000000e+00 : f32
    %26 = vector.broadcast %cst_10 : f32 to vector<8x1xf32>
    %27 = arith.subf %26, %2 : vector<8x1xf32>
    %28 = arith.mulf %27, %25 : vector<8x1xf32>
    %29 = arith.mulf %28, %19 : vector<8x1xf32>
    %c0_11 = arith.constant 0 : index
    %30 = memref.load %arg1[%c0_11] : memref<1xi32, #tpu.memory_space<smem>>
    %c8_i32 = arith.constant 8 : i32
    %31 = arith.muli %arg0, %c8_i32 : i32
    %32 = tpu.iota {dimensions = array<i32: 0>} : vector<8x1xi32>
    %33 = vector.broadcast %31 : i32 to vector<8x1xi32>
    %34 = arith.addi %33, %32 : vector<8x1xi32>
    %35 = vector.broadcast %30 : i32 to vector<8x1xi32>
    %36 = arith.cmpi slt, %34, %35 : vector<8x1xi32>
    %cst_12 = arith.constant 0.000000e+00 : f32
    %37 = vector.broadcast %cst_12 : f32 to vector<8x1xf32>
    %38 = arith.select %36, %29, %37 : vector<8x1xi1>, vector<8x1xf32>
    %39 = vector.shape_cast %38 : vector<8x1xf32> to vector<1x8x1xf32>
    %cst_13 = arith.constant dense<0.000000e+00> : vector<1xf32>
    %40 = vector.multi_reduction <add>, %39, %cst_13 [1, 2] : vector<1x8x1xf32> to vector<1xf32>
    %41 = vector.shape_cast %40 : vector<1xf32> to vector<1x1x1xf32>
    %42 = vector.extract %41[0, 0, 0] : f32 from vector<1x1x1xf32>
    %43 = tpu.iota {dimensions = array<i32: 0>} : vector<8x128xi32>
    %44 = tpu.iota {dimensions = array<i32: 1>} : vector<8x128xi32>
    %c0_i32 = arith.constant 0 : i32
    %45 = vector.broadcast %c0_i32 : i32 to vector<8x128xi32>
    %46 = arith.cmpi eq, %43, %45 : vector<8x128xi32>
    %c0_i32_14 = arith.constant 0 : i32
    %47 = vector.broadcast %c0_i32_14 : i32 to vector<8x128xi32>
    %48 = arith.cmpi eq, %44, %47 : vector<8x128xi32>
    %49 = arith.andi %46, %48 : vector<8x128xi1>
    %cst_15 = arith.constant 0.000000e+00 : f32
    %50 = vector.broadcast %42 : f32 to vector<8x128xf32>
    %51 = vector.broadcast %cst_15 : f32 to vector<8x128xf32>
    %52 = arith.select %49, %50, %51 : vector<8x128xi1>, vector<8x128xf32>
    %c0_16 = arith.constant 0 : index
    %c0_17 = arith.constant 0 : index
    %53 = vector.load %arg5[%c0_16, %c0_17] : memref<8x128xf32, #tpu.memory_space<vmem>>, vector<8x128xf32>
    tpu.vector_store %arg5[%c0_16, %c0_17], %52 {strides = array<i32>} : memref<8x128xf32, #tpu.memory_space<vmem>>, vector<8x128xf32>,
    return
  }
  func.func @transform_0(%arg0: i32) -> i32 {
    %c0_i32 = arith.constant 0 : i32
    %c0_i32_0 = arith.constant 0 : i32
    return %c0_i32 : i32
  }
  func.func @transform_1(%arg0: i32) -> (i32, i32) {
    %c0_i32 = arith.constant 0 : i32
    %c0_i32_0 = arith.constant 0 : i32
    return %arg0, %c0_i32 : i32, i32
  }
  func.func @transform_2(%arg0: i32) -> (i32, i32) {
    %c0_i32 = arith.constant 0 : i32
    %c0_i32_0 = arith.constant 0 : i32
    return %arg0, %c0_i32 : i32, i32
  }
  func.func @transform_3(%arg0: i32) -> (i32, i32) {
    %c0_i32 = arith.constant 0 : i32
    %c0_i32_0 = arith.constant 0 : i32
    return %arg0, %c0_i32 : i32, i32
  }
  func.func @transform_4(%arg0: i32) -> (i32, i32) {
    %c0_i32 = arith.constant 0 : i32
    %c0_i32_0 = arith.constant 0 : i32
    return %arg0, %c0_i32 : i32, i32
  }
}

</mosaic_0001>

<llo_original>
// kernel: tpu_custom_call.1
$region0: #{tpu_custom_call.1}
  #allocation0 [shape = 'u32[]', space=smem, size = 0x4, offset = 0x4, fixed_abs, tag = 'smem constant byte address 0x4 - core index']
  #allocation1 [shape = 'u32[144,128]{1,0:T(1,128)}', space=vmem, size = 0x12000, scoped, tag = 'internal scratch']
  #allocation2 [shape = 's32[1]{0:T(128)S(6)}', space=smem, size = 0x200, scoped, tag = 'scoped memory for tpu_custom_call.1']
  %s0 = inlined_call_operand.<no memory space> [shape: s32[1], index: 0, kind: input, shape index: {}]
  %s1 = inlined_call_operand.vmem [shape: f32[12,16], index: 1, kind: input, shape index: {}]
  %s2 = inlined_call_operand.vmem [shape: s32[12,1], index: 2, kind: input, shape index: {}]
  %s3 = inlined_call_operand.vmem [shape: f32[12,1], index: 3, kind: input, shape index: {}]
  %s4 = inlined_call_operand.hbm [shape: f32[16,128], index: 4, kind: output, shape index: {}]
  %s5 = sld [smem:[#allocation0]]
  $region49: #{tpu_custom_call.1} parent=0
    _
  %s7 = ssub.s32 1, %s5
  %s8 = scalar_select 0, %s7, %s5
  %9 = sst [smem:[#allocation2]] %s0
  $region1: #{tpu_custom_call.1} parent=0
    #allocation3 [shape = 'u8[8192]{0}', space=vmem, size = 0x2000, scoped, tag = 'output window, operand 0']
    #allocation4 [shape = 's32[2]{0}', space=sflag, size = 0x8, scoped, tag = 'scoped memory for tpu_custom_call.1']
    %10 = vsyncpa [#allocation4], 0
    %s11 = scalar_lea.sflag [#allocation4], 1
    %12 = vsyncpa %s11, 0
    loop: start=0, step=1, limit=4
    $region2: #{tpu_custom_call.1} parent=1 // loop_pre_header
      _
    $region3: #{tpu_custom_call.1} parent=1 // loop_header
      %s14 = sphi 0, %s18
      %p15 = scmp.ge.s32.totalorder %s14, 4
      %s22 = sphi 0, %s22
      %s24 = sphi 0, %s22
      %s25 = sphi 0, %s24
      %s39 = sphi 0, %s25
      %s45 = sphi 0, %s47
      %s48 = sphi 0, %s45
      %s49 = sphi 0, %s48
      %s65 = sphi 0, %s49
      %s71 = sphi 0, %s73
      %s74 = sphi 0, %s71
      %s75 = sphi 0, %s74
      %s91 = sphi 0, %s75
      %s97 = sphi 0, %s99
      %s100 = sphi 0, %s97
      %s101 = sphi 0, %s100
      %s117 = sphi 0, %s101
      %s123 = sphi 0, %s125
      %s126 = sphi 0, %s123
      %s127 = sphi 0, %s126
      %s143 = sphi 0, %s127
    $region4: #{tpu_custom_call.1} parent=1 // loop_header_branch
      %17 = sbr.rel (%p15) target = $region8
    $region5: #{tpu_custom_call.1} parent=1 // loop_body
      %s19 = ssub.s32 %s14, 1
      %s20 = ssub.s32 %s14, 2
      %s21 = sadd.s32 %s14, 1
      %s23 = sadd.s32 %s22, 1
      %p26 = scmp.eq.s32.totalorder %s14, 1
      %p27 = scmp.ne.s32.totalorder %s22, %s24
      %p28 = scmp.eq.s32.totalorder %s14, 0
      %p29 = por %p27, %p28
      %p30 = scmp.ne.s32.totalorder %s22, %s24
      %p31 = scmp.eq.s32.totalorder %s19, 1
      %p32 = por %p30, %p31
      %p33 = scmp.ne.s32.totalorder %s24, %s25
      %p34 = scmp.eq.s32.totalorder %s19, 0
      %p35 = por %p33, %p34
      %p36 = scmp.ne.s32.totalorder %s24, %s25
      %p37 = scmp.eq.s32.totalorder %s20, 1
      %p38 = por %p36, %p37
      %p40 = scmp.ne.s32.totalorder %s25, %s39
      %p41 = scmp.eq.s32.totalorder %s20, 0
      %p42 = por %p40, %p41
      %s43 = ssub.s32 %s14, %s21
      %p44 = scmp.eq.s32.totalorder %s43, 0
      %s46 = sadd.s32 %s45, 1
      %s47 = scalar_select %p44, %s45, %s46
      %p50 = pneg %p44
      %p51 = scmp.eq.s32.totalorder %s14, 1
      %p52 = por %p50, %p51
      %p53 = scmp.ne.s32.totalorder %s45, %s48
      %p54 = scmp.eq.s32.totalorder %s14, 0
      %p55 = por %p53, %p54
      %p56 = scmp.ne.s32.totalorder %s45, %s48
      %p57 = scmp.eq.s32.totalorder %s19, 1
      %p58 = por %p56, %p57
      %p59 = scmp.ne.s32.totalorder %s48, %s49
      %p60 = scmp.eq.s32.totalorder %s19, 0
      %p61 = por %p59, %p60
      %p62 = scmp.ne.s32.totalorder %s48, %s49
      %p63 = scmp.eq.s32.totalorder %s20, 1
      %p64 = por %p62, %p63
      %p66 = scmp.ne.s32.totalorder %s49, %s65
      %p67 = scmp.eq.s32.totalorder %s20, 0
      %p68 = por %p66, %p67
      %s69 = ssub.s32 %s14, %s21
      %p70 = scmp.eq.s32.totalorder %s69, 0
      %s72 = sadd.s32 %s71, 1
      %s73 = scalar_select %p70, %s71, %s72
      %p76 = pneg %p70
      %p77 = scmp.eq.s32.totalorder %s14, 1
      %p78 = por %p76, %p77
      %p79 = scmp.ne.s32.totalorder %s71, %s74
      %p80 = scmp.eq.s32.totalorder %s14, 0
      %p81 = por %p79, %p80
      %p82 = scmp.ne.s32.totalorder %s71, %s74
      %p83 = scmp.eq.s32.totalorder %s19, 1
      %p84 = por %p82, %p83
      %p85 = scmp.ne.s32.totalorder %s74, %s75
      %p86 = scmp.eq.s32.totalorder %s19, 0
      %p87 = por %p85, %p86
      %p88 = scmp.ne.s32.totalorder %s74, %s75
      %p89 = scmp.eq.s32.totalorder %s20, 1
      %p90 = por %p88, %p89
      %p92 = scmp.ne.s32.totalorder %s75, %s91
      %p93 = scmp.eq.s32.totalorder %s20, 0
      %p94 = por %p92, %p93
      %s95 = ssub.s32 %s14, %s21
      %p96 = scmp.eq.s32.totalorder %s95, 0
      %s98 = sadd.s32 %s97, 1
      %s99 = scalar_select %p96, %s97, %s98
      %p102 = pneg %p96
      %p103 = scmp.eq.s32.totalorder %s14, 1
      %p104 = por %p102, %p103
      %p105 = scmp.ne.s32.totalorder %s97, %s100
      %p106 = scmp.eq.s32.totalorder %s14, 0
      %p107 = por %p105, %p106
      %p108 = scmp.ne.s32.totalorder %s97, %s100
      %p109 = scmp.eq.s32.totalorder %s19, 1
      %p110 = por %p108, %p109
      %p111 = scmp.ne.s32.totalorder %s100, %s101
      %p112 = scmp.eq.s32.totalorder %s19, 0
      %p113 = por %p111, %p112
      %p114 = scmp.ne.s32.totalorder %s100, %s101
      %p115 = scmp.eq.s32.totalorder %s20, 1
      %p116 = por %p114, %p115
      %p118 = scmp.ne.s32.totalorder %s101, %s117
      %p119 = scmp.eq.s32.totalorder %s20, 0
      %p120 = por %p118, %p119
      %s121 = ssub.s32 %s14, %s21
      %p122 = scmp.eq.s32.totalorder %s121, 0
      %s124 = sadd.s32 %s123, 1
      %s125 = scalar_select %p122, %s123, %s124
      %p128 = pneg %p122
      %p129 = scmp.eq.s32.totalorder %s14, 1
      %p130 = por %p128, %p129
      %p131 = scmp.ne.s32.totalorder %s123, %s126
      %p132 = scmp.eq.s32.totalorder %s14, 0
      %p133 = por %p131, %p132
      %p134 = scmp.ne.s32.totalorder %s123, %s126
      %p135 = scmp.eq.s32.totalorder %s19, 1
      %p136 = por %p134, %p135
      %p137 = scmp.ne.s32.totalorder %s126, %s127
      %p138 = scmp.eq.s32.totalorder %s19, 0
      %p139 = por %p137, %p138
      %p140 = scmp.ne.s32.totalorder %s126, %s127
      %p141 = scmp.eq.s32.totalorder %s20, 1
      %p142 = por %p140, %p141
      %p144 = scmp.ne.s32.totalorder %s127, %s143
      %p145 = scmp.eq.s32.totalorder %s20, 0
      %p146 = por %p144, %p145
      %p147 = scmp.le.s32.totalorder 1, %s14
      %p148 = scmp.lt.s32.totalorder %s14, 3
      %p149 = pnand %p147, %p148
      %p150 = pneg %p149
      // Predicated region
      $region9: #{tpu_custom_call.1} parent=5 // pred_check
        _
      $region10: #{tpu_custom_call.1} parent=5 // pred_check_branch
        %152 = sbr.rel (%p149) target = $region12
      $region11: #{tpu_custom_call.1} parent=5 // pred_region
        %s153 = ssub.s32 %s14, 1
        // Predicated region
        $region13: #{tpu_custom_call.1} parent=11 // pred_check
          %p154 = pneg %p35
        $region14: #{tpu_custom_call.1} parent=11 // pred_check_branch
          %156 = sbr.rel (%p154) target = $region16
        $region15: #{tpu_custom_call.1} parent=11 // pred_region
          _
        $region16: #{tpu_custom_call.1} parent=11 // pred_fallthru
          _
      $region12: #{tpu_custom_call.1} parent=5 // pred_fallthru
        _
      %p157 = scmp.lt.s32.totalorder %s14, 2
      // Predicated region
      $region17: #{tpu_custom_call.1} parent=5 // pred_check
        %p158 = pneg %p157
      $region18: #{tpu_custom_call.1} parent=5 // pred_check_branch
        %160 = sbr.rel (%p158) target = $region20
      $region19: #{tpu_custom_call.1} parent=5 // pred_region
        // Predicated region
        $region21: #{tpu_custom_call.1} parent=19 // pred_check
          %p161 = pneg %p55
        $region22: #{tpu_custom_call.1} parent=19 // pred_check_branch
          %163 = sbr.rel (%p161) target = $region24
        $region23: #{tpu_custom_call.1} parent=19 // pred_region
          %p164 = scmp.lt.s32.totalorder %s14, 1
          %s165 = scalar_select %p164, %s14, 1
          %s166 = smul.addr %s165, 8
          %s167 = scalar_lea.vmem %s1, %s166
        $region24: #{tpu_custom_call.1} parent=19 // pred_fallthru
          _
        // Predicated region
        $region25: #{tpu_custom_call.1} parent=19 // pred_check
          %p168 = pneg %p81
        $region26: #{tpu_custom_call.1} parent=19 // pred_check_branch
          %170 = sbr.rel (%p168) target = $region28
        $region27: #{tpu_custom_call.1} parent=19 // pred_region
          %p171 = scmp.lt.s32.totalorder %s14, 1
          %s172 = scalar_select %p171, %s14, 1
          %s173 = smul.addr %s172, 8
          %s174 = scalar_lea.vmem %s2, %s173
        $region28: #{tpu_custom_call.1} parent=19 // pred_fallthru
          _
        // Predicated region
        $region29: #{tpu_custom_call.1} parent=19 // pred_check
          %p175 = pneg %p107
        $region30: #{tpu_custom_call.1} parent=19 // pred_check_branch
          %177 = sbr.rel (%p175) target = $region32
        $region31: #{tpu_custom_call.1} parent=19 // pred_region
          %p178 = scmp.lt.s32.totalorder %s14, 1
          %s179 = scalar_select %p178, %s14, 1
          %s180 = smul.addr %s179, 8
          %s181 = scalar_lea.vmem %s3, %s180
        $region32: #{tpu_custom_call.1} parent=19 // pred_fallthru
          _
      $region20: #{tpu_custom_call.1} parent=5 // pred_fallthru
        _
      %p182 = scmp.le.s32.totalorder 1, %s14
      %p183 = scmp.lt.s32.totalorder %s14, 3
      %p184 = pnand %p182, %p183
      %p185 = pneg %p184
      // Predicated region
      $region33: #{tpu_custom_call.1} parent=5 // pred_check
        _
      $region34: #{tpu_custom_call.1} parent=5 // pred_check_branch
        %187 = sbr.rel (%p184) target = $region36
      $region35: #{tpu_custom_call.1} parent=5 // pred_region
        %s188 = ssub.s32 %s14, 1
        %p189 = pneg %p35
        %p190 = pneg %p32
        %p191 = scmp.lt.s32.totalorder %s19, 1
        %s192 = scalar_select %p191, %s19, 1
        %s193 = smul.addr %s192, 8
        %s194 = scalar_lea.vmem %s1, %s193
        %p195 = pneg %p61
        %p196 = pneg %p58
        %p197 = scmp.lt.s32.totalorder %s19, 1
        %s198 = scalar_select %p197, %s19, 1
        %s199 = smul.addr %s198, 8
        %s200 = scalar_lea.vmem %s2, %s199
        %p201 = pneg %p87
        %p202 = pneg %p84
        %p203 = scmp.lt.s32.totalorder %s19, 1
        %s204 = scalar_select %p203, %s19, 1
        %s205 = smul.addr %s204, 8
        %s206 = scalar_lea.vmem %s3, %s205
        %p207 = pneg %p113
        %p208 = pneg %p110
        %p209 = pneg %p139
        %p210 = pneg %p136
        %s211 = sand.u32 %s126, 1
        %s212 = scalar_lea.sflag [#allocation4], %s211
        %s213 = sand.u32 %s126, 1
        %s214 = smul.addr %s213, 8
        %s215 = scalar_lea.vmem [#allocation3], %s214
        %p216 = scmp.lt.s32.totalorder %s19, 1
        %s217 = scalar_select %p216, %s19, 1
        %s218 = smul.addr %s217, 8
        %s219 = scalar_lea.vmem %s1, %s218
        %p220 = scmp.lt.s32.totalorder %s19, 1
        %s221 = scalar_select %p220, %s19, 1
        %s222 = smul.addr %s221, 8
        %s223 = scalar_lea.vmem %s2, %s222
        %p224 = scmp.lt.s32.totalorder %s19, 1
        %s225 = scalar_select %p224, %s19, 1
        %s226 = smul.addr %s225, 8
        %s227 = scalar_lea.vmem %s3, %s226
        %v228 = vld [vmem:[%s219] sm:$0xff]
        %v229 = vld [vmem:[%s223] sm:$0xff]
        %v230 = vld [vmem:[%s227] sm:$0xff]
        %vm231 = vcmask 130048
        %v232 = vsel %vm231, %v228, -inf
        %233 = vmax.xlane.f32.xlu0 %v232
        %v234 = vpop.xlane.xlu0 %233
        %v235 = vsub.f32 %v228, %v234
        %v236 = vmul.f32 %v235, 1.442695
        %v237 = vpow.pop %v236
        %v238 = vsel %vm231, %v237, 0.0
        %239 = vadd.xlane.f32.xlu0 %v238
        %v240 = vpop.xlane.xlu0 %239
        %v241 = vlaneseq
        %v242 = vand.u32 %v241, 127
        %243 = vset.pattern.permute.xlu0 0
        %244 = vperm.xlu0 %243, %v229
        %v245 = vpop.permute.xlu0 %244
        %vm246 = vcmp.eq.s32.totalorder %v242, %v245
        %v247 = vsel %vm246, %v228, 0.0
        %v248 = vsel %vm231, %v247, 0.0
        %249 = vadd.xlane.f32.xlu0 %v248
        %v250 = vpop.xlane.xlu0 %249
        %v251 = vsub.f32 %v250, %v234
        %v252 = vlog2.pop %v240
        %v253 = vmul.f32 %v252, 0.6931472
        %v254 = vsub.f32 %v251, %v253
        %v255 = vmul.f32 %v254, 1.442695
        %v256 = vpow.pop %v255
        %v257 = vsub.f32 1.0, %v256
        %v258 = vmul.f32 %v257, %v257
        %v259 = vsub.f32 0.0, %v230
        %v260 = vmul.f32 %v259, %v258
        %v261 = vmul.f32 %v260, %v254
        %s262 = sld [smem:[#allocation2]]
        %s263 = smul.u32 %s19, 8
        %v264 = vlaneseq
        %v265 = vshrl.u32 %v264, 7
        %v266 = vstv %s263
        %v267 = vadd.s32 %v266, %v265
        %v268 = vstv %s262
        %vm269 = vcmp.lt.s32.totalorder %v267, %v268
        %v270 = vsel %vm269, %v261, 0.0
        %vm271 = vcmask 7168
        %v272 = vsel %vm271, %v270, 0.0
        %273 = vadd.xlane.f32.xlu0 %v272
        %v274 = vpop.xlane.xlu0 %273
        %v275 = vrot.slane %v274, 4
        %v276 = vadd.f32 %v274, %v275
        %v277 = vrot.slane %v276, 2
        %v278 = vadd.f32 %v276, %v277
        %v279 = vrot.slane %v278, 1
        %v280 = vadd.f32 %v278, %v279
        %s281 = vtos %v280
        %vm282 = vcmp.eq.s32.totalorder %v265, 0
        %vm283 = vcmp.eq.s32.totalorder %v242, 0
        %vm284 = vmand %vm282, %vm283
        %v285 = vstv %s281
        %v286 = vsel %vm284, %v285, 0.0
        %287 = vst [vmem:[%s215] sm:$0xff] %v286
        %s288 = sand.u32 %s126, 1
        %s289 = scalar_lea.sflag [#allocation4], %s288
        %s290 = sand.u32 %s126, 1
        %s291 = smul.addr %s290, 8
        %s292 = scalar_lea.vmem [#allocation3], %s291
        // Predicated region
        $region37: #{tpu_custom_call.1} parent=35 // pred_check
          %p293 = pneg %p136
        $region38: #{tpu_custom_call.1} parent=35 // pred_check_branch
          %295 = sbr.rel (%p293) target = $region40
        $region39: #{tpu_custom_call.1} parent=35 // pred_region
          %s297 = ssub.s32 128, 128
          %298 = vsyncadd %s289, %s297
          %s299 = smul.addr %s19, 128
          %s300 = scalar_lea.hbm %s4, %s299
          %s302 = sshll.u32 %s292, 4
          %s303 = int_to_ptr.vmem [resolvable:$true] %s302
          %305 = dma.vmem_to_hbm [thread:$0]  %s303, 128, %s300, %s289
        $region40: #{tpu_custom_call.1} parent=35 // pred_fallthru
          _
      $region36: #{tpu_custom_call.1} parent=5 // pred_fallthru
        _
      %p306 = scmp.le.s32.totalorder 2, %s14
      // Predicated region
      $region41: #{tpu_custom_call.1} parent=5 // pred_check
        %p307 = pneg %p306
      $region42: #{tpu_custom_call.1} parent=5 // pred_check_branch
        %309 = sbr.rel (%p307) target = $region44
      $region43: #{tpu_custom_call.1} parent=5 // pred_region
        %s310 = ssub.s32 %s14, 2
        // Predicated region
        $region45: #{tpu_custom_call.1} parent=43 // pred_check
          %p311 = pneg %p142
        $region46: #{tpu_custom_call.1} parent=43 // pred_check_branch
          %313 = sbr.rel (%p311) target = $region48
        $region47: #{tpu_custom_call.1} parent=43 // pred_region
          %s314 = sand.u32 %s127, 1
          %s315 = scalar_lea.sflag [#allocation4], %s314
          %s316 = sand.u32 %s127, 1
          %s317 = smul.addr %s316, 8
          %s318 = scalar_lea.vmem [#allocation3], %s317
          %319 = dma.done %s315, 128
        $region48: #{tpu_custom_call.1} parent=43 // pred_fallthru
          _
      $region44: #{tpu_custom_call.1} parent=5 // pred_fallthru
        _
    $region6: #{tpu_custom_call.1} parent=1 // loop_footer
      %s18 = sadd.s32 1, %s14
    $region7: #{tpu_custom_call.1} parent=1 // loop_footer_branch
      %13 = sbr.rel target = $region3
    $region8: #{tpu_custom_call.1} parent=1 // loop_exit
      _
    %320 = vsyncpa [#allocation4], 1
    %s321 = scalar_lea.sflag [#allocation4], 1
    %322 = vsyncpa %s321, 1

</llo_original>
